<compile_context>
chip_gen: v5e
topology: v5e:2x2
jax: 0.10.0
libtpu: 0.0.40
codegen_flags: <defaults>
</compile_context>

<pallas_src>
import functools

import jax
import jax.numpy as jnp
from jax.experimental import pallas as pl
from jax.experimental.pallas import tpu as pltpu

IN_FEATURES = 10
OUT_FEATURES = 1

# Below this many rows the pallas_call is pure launch/step overhead; let XLA
# fuse the tiny GEMV instead (unless the caller forces the kernel).
_KERNEL_MIN_BATCH = 4096
# Force >= 2 grid steps (v7x megacore sharding) once there is this much work.
_MIN_ROWS_FOR_TWO_STEPS = 2048
# VMEM bytes the kernel holds per batch row at any time:
#   x block (TILE_B, 10) f32 -> padded to 128 lanes = 512 B/row, double-buffered
#   y block (TILE_B, 1)  f32 -> padded to 128 lanes = 512 B/row, double-buffered
_VMEM_BYTES_PER_ROW = 2 * 512 + 2 * 512  # = 2048


def _round_up(n: int, m: int) -> int:
    return ((n + m - 1) // m) * m


def _round_down(n: int, m: int) -> int:
    return (n // m) * m


def _vmem_capacity_bytes() -> int:
    """Per-TensorCore VMEM capacity, with a conservative (v7x) fallback."""
    try:
        cap = int(pltpu.get_tpu_info().vmem_capacity_bytes)
    except Exception:
        cap = 0
    if cap < (8 << 20):          # bogus / unavailable -> assume v7x (64 MiB)
        cap = 64 << 20
    return cap


def _pick_tiling(batch: int):
    """Choose (tile_b, n_steps, vmem_limit_bytes) for a given batch size."""
    # Spend at most half of physical VMEM on this kernel's streams.
    budget = _vmem_capacity_bytes() // 2
    tile_cap = max(128, _round_down(budget // _VMEM_BYTES_PER_ROW, 128))

    n_steps = pl.cdiv(batch, tile_cap)
    if n_steps == 1 and batch >= _MIN_ROWS_FOR_TWO_STEPS:
        n_steps = 2              # give both v7x TensorCores work
    tile_b = _round_up(pl.cdiv(batch, n_steps), 8)   # sublane granularity only
    n_steps = pl.cdiv(batch, tile_b)                 # ragged last block is OK

    vmem_limit = tile_b * _VMEM_BYTES_PER_ROW + (4 << 20)   # + headroom
    return tile_b, n_steps, int(vmem_limit)


def _linear_kernel(x_ref, w_ref, b_ref, o_ref):
    # x_ref: (TILE_B, 10) VMEM  -- contiguous row-block of x (no transpose)
    # w_ref: (1, 10)      VMEM  -- nn.Linear weight row, resident across grid
    # b_ref: (1,)         SMEM  -- bias scalar
    # o_ref: (TILE_B, 1)  VMEM  -- output column for the same rows
    prod = x_ref[...] * w_ref[...]                 # VPU elementwise (f32)
    y = jnp.sum(prod, axis=1, keepdims=True)       # XLU lane reduce -> (TILE_B, 1)
    o_ref[...] = y + b_ref[0]                      # scalar bias from SMEM


@functools.partial(jax.jit, static_argnames=("use_kernel",))
def simple_model_forward(x, weight, bias, use_kernel=None):
    """x: (B, 10) f32; weight: (1, 10) f32; bias: (1,) f32 -> (B, 1) f32."""
    batch = x.shape[0]
    if use_kernel is None:
        use_kernel = batch >= _KERNEL_MIN_BATCH
    if not use_kernel:
        # Small-B fast path: the pallas_call would be pure launch overhead.
        return x @ weight.T + bias

    tile_b, n_steps, vmem_limit = _pick_tiling(batch)

    return pl.pallas_call(
        _linear_kernel,
        out_shape=jax.ShapeDtypeStruct((batch, OUT_FEATURES), jnp.float32),
        grid=(n_steps,),
        in_specs=[
            pl.BlockSpec((tile_b, IN_FEATURES), lambda i: (i, 0)),      # x row-blocks
            pl.BlockSpec((1, IN_FEATURES), lambda i: (0, 0)),           # resident weight
            pl.BlockSpec(memory_space=pltpu.MemorySpace.SMEM),          # bias scalar
        ],
        out_specs=pl.BlockSpec((tile_b, OUT_FEATURES), lambda i: (i, 0)),
        compiler_params=pltpu.CompilerParams(
            dimension_semantics=("parallel",),
            vmem_limit_bytes=vmem_limit,
        ),
        cost_estimate=pl.CostEstimate(
            flops=2 * IN_FEATURES * batch,
            bytes_accessed=4 * (IN_FEATURES + OUT_FEATURES) * batch
            + 4 * (IN_FEATURES + OUT_FEATURES),
            transcendentals=0,
        ),
    )(x, weight, bias)


if __name__ == "__main__":
    key = jax.random.PRNGKey(0)
    k_x, k_w, k_b = jax.random.split(key, 3)

    B = 8  # small demo shape; the same code scales to large B via the tiling above

    # Deterministic parameter init (mimics nn.Linear's uniform(-1/sqrt(in), 1/sqrt(in)))
    bound = 1.0 / (IN_FEATURES ** 0.5)
    weight = jax.random.uniform(
        k_w, (OUT_FEATURES, IN_FEATURES), jnp.float32, minval=-bound, maxval=bound
    )
    bias = jax.random.uniform(
        k_b, (OUT_FEATURES,), jnp.float32, minval=-bound, maxval=bound
    )
    x = jax.random.normal(k_x, (B, IN_FEATURES), jnp.float32)

    # Exercise the Pallas kernel itself (the demo B is below the fast-path
    # threshold, so force the kernel path explicitly).
    out = jax.block_until_ready(simple_model_forward(x, weight, bias, use_kernel=True))

    ref = x @ weight.T + bias
    assert out.shape == (B, OUT_FEATURES)
    assert jnp.allclose(out, ref, atol=1e-5, rtol=1e-5)

    # Also check the small-B fast path used for tiny batches in production.
    out_fast = jax.block_until_ready(simple_model_forward(x, weight, bias))
    assert jnp.allclose(out_fast, ref, atol=1e-5, rtol=1e-5)

    print("KERNEL_OK")
</pallas_src>

<mosaic_0001>
module attributes {stable_mosaic.version = 11 : i64} {
  func.func @_linear_kernel(%arg0: i32, %arg1: memref<8x10xf32, #tpu.memory_space<vmem>>, %arg2: memref<1x10xf32, #tpu.memory_space<vmem>>, %arg3: memref<1xf32, #tpu.memory_space<smem>>, %arg4: memref<8x1xf32, #tpu.memory_space<vmem>>) attributes {dimension_semantics = [#tpu.dimension_semantics<parallel>], iteration_bounds = array<i64: 1>, scalar_prefetch = 0 : i64, scratch_operands = 0 : i64, tpu.core_type = #tpu.core_type<tc>, window_params = [{transform_indices = @transform_0, window_bounds = array<i64: 8, 10>}, {pipeline_mode = #tpu.pipeline_mode<synchronous>, transform_indices = @transform_1, window_bounds = array<i64: 1, 10>}, {transform_indices = @transform_2, window_bounds = array<i64: 1>}, {transform_indices = @transform_3, window_bounds = array<i64: 8, 1>}]} {
    %c0 = arith.constant 0 : index
    %c0_0 = arith.constant 0 : index
    %0 = vector.load %arg1[%c0, %c0_0] : memref<8x10xf32, #tpu.memory_space<vmem>>, vector<8x10xf32>
    %c0_1 = arith.constant 0 : index
    %c0_2 = arith.constant 0 : index
    %1 = vector.load %arg2[%c0_1, %c0_2] : memref<1x10xf32, #tpu.memory_space<vmem>>, vector<1x10xf32>
    %2 = vector.broadcast %1 : vector<1x10xf32> to vector<8x10xf32>
    %3 = arith.mulf %0, %2 : vector<8x10xf32>
    %cst = arith.constant dense<0.000000e+00> : vector<8xf32>
    %4 = vector.multi_reduction <add>, %3, %cst [1] : vector<8x10xf32> to vector<8xf32>
    %5 = vector.shape_cast %4 : vector<8xf32> to vector<8x1xf32>
    %c0_3 = arith.constant 0 : index
    %6 = memref.load %arg3[%c0_3] : memref<1xf32, #tpu.memory_space<smem>>
    %7 = vector.broadcast %6 : f32 to vector<8x1xf32>
    %8 = arith.addf %5, %7 : vector<8x1xf32>
    %c0_4 = arith.constant 0 : index
    %c0_5 = arith.constant 0 : index
    %9 = vector.load %arg4[%c0_4, %c0_5] : memref<8x1xf32, #tpu.memory_space<vmem>>, vector<8x1xf32>
    tpu.vector_store %arg4[%c0_4, %c0_5], %8 {strides = array<i32>} : memref<8x1xf32, #tpu.memory_space<vmem>>, vector<8x1xf32>,
    return
  }
  func.func @transform_0(%arg0: i32) -> (i32, i32) {
    %c0_i32 = arith.constant 0 : i32
    %c0_i32_0 = arith.constant 0 : i32
    return %arg0, %c0_i32 : i32, i32
  }
  func.func @transform_1(%arg0: i32) -> (i32, i32) {
    %c0_i32 = arith.constant 0 : i32
    %c0_i32_0 = arith.constant 0 : i32
    %c0_i32_1 = arith.constant 0 : i32
    return %c0_i32, %c0_i32_0 : i32, i32
  }
  func.func @transform_2(%arg0: i32) -> i32 {
    %c0_i32 = arith.constant 0 : i32
    %c0_i32_0 = arith.constant 0 : i32
    return %c0_i32 : i32
  }
  func.func @transform_3(%arg0: i32) -> (i32, i32) {
    %c0_i32 = arith.constant 0 : i32
    %c0_i32_0 = arith.constant 0 : i32
    return %arg0, %c0_i32 : i32, i32
  }
}

</mosaic_0001>

<llo_original>
// kernel: simple_model_forward.1
$region0: #{simple_model_forward.1}
  #allocation0 [shape = 'u32[]', space=smem, size = 0x4, offset = 0x4, fixed_abs, tag = 'smem constant byte address 0x4 - core index']
  #allocation1 [shape = 'u32[72,128]{1,0:T(1,128)}', space=vmem, size = 0x9000, scoped, tag = 'internal scratch']
  #allocation2 [shape = 'f32[1]{0:T(128)S(6)}', space=smem, size = 0x200, scoped, tag = 'scoped memory for simple_model_forward.1']
  %s0 = inlined_call_operand.hbm [shape: f32[8,10], index: 0, kind: input, shape index: {}]
  %s1 = inlined_call_operand.vmem [shape: f32[1,10], index: 1, kind: input, shape index: {}]
  %s2 = inlined_call_operand.<no memory space> [shape: f32[1], index: 2, kind: input, shape index: {}]
  %s3 = inlined_call_operand.vmem [shape: f32[8,1], index: 3, kind: output, shape index: {}]
  %s4 = sld [smem:[#allocation0]]
  $region26: #{simple_model_forward.1} parent=0
    _
  %s6 = ssub.s32 1, %s4
  %s7 = scalar_select 0, %s6, %s4
  %8 = sst [smem:[#allocation2]] %s2
  $region1: #{simple_model_forward.1} parent=0
    #allocation3 [shape = 'u8[4096]{0}', space=vmem, size = 0x1000, scoped, tag = 'input window, operand 0, single buffered']
    #allocation4 [shape = 's32[1]{0}', space=sflag, size = 0x4, scoped, tag = 'scoped memory for simple_model_forward.1']
    %9 = vsyncpa [#allocation4], 0
    // Predicated region
    $region2: #{simple_model_forward.1} parent=1 // pred_check
      _
    $region3: #{simple_model_forward.1} parent=1 // pred_check_branch
      %11 = sbr.rel (0) target = $region5
    $region4: #{simple_model_forward.1} parent=1 // pred_region
      %13 = vsyncadd [#allocation4], 0
      %s15 = sshll.u32 %s0, 4
      %s16 = int_to_ptr.hbm [resolvable:$true] %s15
      %s17 = sshll.u32 [#allocation3], 4
      %s18 = int_to_ptr.vmem [resolvable:$true] %s17
      %20 = dma.hbm_to_vmem [thread:$0]  %s16, 128, %s18, [#allocation4]
    $region5: #{simple_model_forward.1} parent=1 // pred_fallthru
      _
    // Predicated region
    $region6: #{simple_model_forward.1} parent=1 // pred_check
      _
    $region7: #{simple_model_forward.1} parent=1 // pred_check_branch
      %22 = sbr.rel (0) target = $region9
    $region8: #{simple_model_forward.1} parent=1 // pred_region
      _
    $region9: #{simple_model_forward.1} parent=1 // pred_fallthru
      _
    // Predicated region
    $region10: #{simple_model_forward.1} parent=1 // pred_check
      _
    $region11: #{simple_model_forward.1} parent=1 // pred_check_branch
      %24 = sbr.rel (0) target = $region13
    $region12: #{simple_model_forward.1} parent=1 // pred_region
      _
    $region13: #{simple_model_forward.1} parent=1 // pred_fallthru
      _
    // Predicated region
    $region14: #{simple_model_forward.1} parent=1 // pred_check
      _
    $region15: #{simple_model_forward.1} parent=1 // pred_check_branch
      %26 = sbr.rel (0) target = $region17
    $region16: #{simple_model_forward.1} parent=1 // pred_region
      %28 = dma.done [#allocation4], 128
    $region17: #{simple_model_forward.1} parent=1 // pred_fallthru
      _
    %v29 = vld [vmem:[#allocation3] sm:$0xff]
    %v30 = vld [vmem:[%s1] sm:$0x1]
    %v32 = vperm.slane %v30, 0
    %v34 = vmul.f32 %v29, %v32
    %vm35 = vcmask 80896
    %v36 = vsel %vm35, %v34, 0.0
    %37 = vadd.xlane.f32.xlu0 %v36
    %v38 = vpop.xlane.xlu0 %37
    %s39 = sld [smem:[#allocation2]]
    %v40 = vstv %s39
    %v41 = vadd.f32 %v38, %v40
    %vm42 = vcmask 7168
    %43 = vst.msk [vmem:[%s3] sm:$0xff] %vm42, %v41
    // Predicated region
    $region18: #{simple_model_forward.1} parent=1 // pred_check
      _
    $region19: #{simple_model_forward.1} parent=1 // pred_check_branch
      %45 = sbr.rel (0) target = $region21
    $region20: #{simple_model_forward.1} parent=1 // pred_region
      _
    $region21: #{simple_model_forward.1} parent=1 // pred_fallthru
      _
    // Predicated region
    $region22: #{simple_model_forward.1} parent=1 // pred_check
      _
    $region23: #{simple_model_forward.1} parent=1 // pred_check_branch
      %47 = sbr.rel (0) target = $region25
    $region24: #{simple_model_forward.1} parent=1 // pred_region
      _
    $region25: #{simple_model_forward.1} parent=1 // pred_fallthru
      _
    %48 = vsyncpa [#allocation4], 1

</llo_original>
